<compile_context>
chip_gen: v6e
topology: v6e:2x2x1
jax: 0.10.0
libtpu: 0.0.40
codegen_flags: <defaults>
</compile_context>

<pallas_src>
import jax
import jax.numpy as jnp
from jax import lax
from jax.experimental import pallas as pl
from jax.experimental.pallas import tpu as pltpu


_MAX_BLOCK_ROWS = 16384     # hard cap on the row tile (amortizes ~0.35 us/step)
_MIN_GRID_STEPS = 4         # keep both v7x TensorCores fed under "parallel"


def _round_up(n: int, m: int) -> int:
    return ((n + m - 1) // m) * m


def _vmem_limit_bytes() -> int:
    """Generation-aware scoped-VMEM limit (v7x has 64 MiB, v5e/v6e 128 MiB)."""
    try:
        cap = int(pltpu.get_tpu_info().vmem_capacity_bytes)
    except Exception:
        cap = 64 * 1024 * 1024            # conservative fallback (v7x per-TC)
    if cap >= 128 * 1024 * 1024:
        return 100 * 1024 * 1024          # v5e / v6e: use the headroom
    return 48 * 1024 * 1024               # v7x


def _choose_row_tile(BL: int, D: int, NL: int, x_itemsize: int,
                     vmem_limit: int) -> int:
    """Row-tile TM for the flattened B*L axis.

    Double-buffered streaming working set per row:
      x tile (as-produced dtype):   2 * D * itemsize
      out^T tile (f32, >=8 subl):   2 * round_up(NL, 8) * 4
    The lane-dense transposed output block (NL, TM) requires TM % 128 == 0
    unless TM == BL (per-dim full-extent exception).
    """
    bytes_per_row = 2 * D * x_itemsize + 2 * _round_up(NL, 8) * 4
    budget = vmem_limit // 2              # headroom: resident W/bias + scratch
    tm = min(budget // bytes_per_row,
             pl.cdiv(BL, _MIN_GRID_STEPS),
             _MAX_BLOCK_ROWS)
    tm = (tm // 128) * 128
    if tm >= BL:
        return BL
    if tm < 128:
        # Small problem -> single full block; (pathologically) huge D -> 128.
        return BL if BL <= 512 else 128
    return tm


def _state_kernel(x_ref, w_ref, b_ref, out_ref):
    """One row-tile of the state linear layer, emitted transposed.

    x_ref  : [TM, D]   input tile as produced (streamed, double-buffered)
    w_ref  : [NL, D]   bf16 weight, resident across the grid
    b_ref  : [NL, 1]   f32 bias column, resident across the grid
    out_ref: [NL, TM]  f32 state scores^T (lane-dense store)
    """
    x16 = x_ref[...].astype(jnp.bfloat16)           # in-kernel cast (VPU, free)
    acc = lax.dot_general(                          # W @ x^T -> [NL, TM], f32 acc
        w_ref[...], x16,
        dimension_numbers=(((1,), (1,)), ((), ())),
        preferred_element_type=jnp.float32,
    )
    out_ref[...] = acc + b_ref[...]


def _forward_impl(x, state_w, state_b, LE):
    """Equivalent of ChainCRF_with_LE.forward(input=x, LE=LE).

    x       : [B, L, D]
    state_w : [NL, D]     nn.Linear weight (NL = num_labels + 1)
    state_b : [NL]        nn.Linear bias
    LE      : [NL-1, E]   label embeddings
    returns (out_s [B, L, NL, 1], out_t [NL, NL])
    """
    B, L, D = x.shape
    NL = state_w.shape[0]
    BL = B * L

    vmem_limit = _vmem_limit_bytes()
    TM = _choose_row_tile(BL, D, NL, x.dtype.itemsize, vmem_limit)
    n_blocks = pl.cdiv(BL, TM)

    x2d = x.reshape(BL, D)                              # free reshape, no cast
    w16 = state_w.astype(jnp.bfloat16)                  # tiny, resident
    b_col = state_b.astype(jnp.float32).reshape(NL, 1)  # tiny, resident

    out_sT = pl.pallas_call(
        _state_kernel,
        out_shape=jax.ShapeDtypeStruct((NL, BL), jnp.float32),
        grid=(n_blocks,),
        in_specs=[
            pl.BlockSpec((TM, D), lambda i: (i, 0)),    # x rows: streamed
            pl.BlockSpec((NL, D), lambda i: (0, 0)),    # W: resident
            pl.BlockSpec((NL, 1), lambda i: (0, 0)),    # bias: resident
        ],
        out_specs=pl.BlockSpec((NL, TM), lambda i: (0, i)),   # lane-dense out^T
        compiler_params=pltpu.CompilerParams(
            dimension_semantics=("parallel",),
            vmem_limit_bytes=vmem_limit,
        ),
    )(x2d, w16, b_col)

    # Layout plumbing back to the module's output contract: [B, L, NL, 1].
    out_s = out_sT.T.reshape(B, L, NL)[..., None]

    # Transition scores: tiny (~NLxNL) gram, computed with plain jnp (a
    # dedicated kernel launch would cost more than the whole main kernel).
    le = LE.astype(jnp.float32)
    gram = jnp.matmul(le, le.T, precision=lax.Precision.HIGHEST)   # [NL-1, NL-1]
    out_t = jnp.pad(gram, ((0, 1), (0, 1)))                        # zero row+col

    return out_s, out_t


chain_crf_with_le_forward = jax.jit(_forward_impl)


if __name__ == "__main__":
    def run_case(key, B, L, D, num_labels, E, zero_bias):
        NL = num_labels + 1
        kx, kw, kb, kle = jax.random.split(key, 4)
        x = jax.random.normal(kx, (B, L, D), dtype=jnp.float32)
        bound = 1.0 / (D ** 0.5)
        state_w = jax.random.uniform(kw, (NL, D), minval=-bound, maxval=bound,
                                     dtype=jnp.float32)
        if zero_bias:   # module's reset_parameters() state
            state_b = jnp.zeros((NL,), dtype=jnp.float32)
        else:           # exercise the (learnable) bias-add path
            state_b = jax.random.uniform(kb, (NL,), minval=-0.1, maxval=0.1,
                                         dtype=jnp.float32)
        LE = jax.random.normal(kle, (num_labels, E), dtype=jnp.float32)

        out_s, out_t = chain_crf_with_le_forward(x, state_w, state_b, LE)
        out_s = jax.block_until_ready(out_s)
        out_t = jax.block_until_ready(out_t)

        # Pure-JAX reference (PyTorch forward semantics). Operands rounded to
        # bf16 to mirror the kernel's in-kernel cast before the MXU dot.
        xb = x.astype(jnp.bfloat16).astype(jnp.float32)
        wb = state_w.astype(jnp.bfloat16).astype(jnp.float32)
        ref_s = (xb @ wb.T + state_b)[..., None]                    # [B,L,NL,1]
        gram = jnp.matmul(LE, LE.T, precision=lax.Precision.HIGHEST)
        ref_t = jnp.zeros((NL, NL), jnp.float32).at[:NL - 1, :NL - 1].set(gram)

        assert out_s.shape == (B, L, NL, 1)
        assert out_t.shape == (NL, NL)
        assert jnp.allclose(out_s, ref_s, atol=2e-3, rtol=2e-3)
        assert jnp.allclose(out_t, ref_t, atol=1e-5, rtol=1e-5)

    key = jax.random.PRNGKey(0)
    k1, k2 = jax.random.split(key)

    # Spec-consistent small shapes: batch=2, length=8, input=32, labels=5, E=16.
    run_case(k1, B=2, L=8, D=32, num_labels=5, E=16, zero_bias=True)

    # Slightly larger case exercising the multi-block "parallel" grid path
    # (BL=512 -> TM=128 -> 4 grid steps).
    assert _choose_row_tile(512, 32, 6, 4, 48 * 1024 * 1024) == 128
    run_case(k2, B=4, L=128, D=32, num_labels=5, E=16, zero_bias=False)

    print("KERNEL_OK")
</pallas_src>

<mosaic_0001>
module attributes {stable_mosaic.version = 11 : i64} {
  func.func @_state_kernel(%arg0: i32, %arg1: memref<16x32xf32, #tpu.memory_space<vmem>>, %arg2: memref<6x32xbf16, #tpu.memory_space<vmem>>, %arg3: memref<6x1xf32, #tpu.memory_space<vmem>>, %arg4: memref<6x16xf32, #tpu.memory_space<vmem>>) attributes {dimension_semantics = [#tpu.dimension_semantics<parallel>], iteration_bounds = array<i64: 1>, scalar_prefetch = 0 : i64, scratch_operands = 0 : i64, tpu.core_type = #tpu.core_type<tc>, window_params = [{transform_indices = @transform_0, window_bounds = array<i64: 16, 32>}, {pipeline_mode = #tpu.pipeline_mode<synchronous>, transform_indices = @transform_1, window_bounds = array<i64: 6, 32>}, {pipeline_mode = #tpu.pipeline_mode<synchronous>, transform_indices = @transform_2, window_bounds = array<i64: 6, 1>}, {transform_indices = @transform_3, window_bounds = array<i64: 6, 16>}]} {
    %c0 = arith.constant 0 : index
    %c0_0 = arith.constant 0 : index
    %0 = vector.load %arg1[%c0, %c0_0] : memref<16x32xf32, #tpu.memory_space<vmem>>, vector<16x32xf32>
    %1 = arith.truncf %0 : vector<16x32xf32> to vector<16x32xbf16>
    %c0_1 = arith.constant 0 : index
    %c0_2 = arith.constant 0 : index
    %2 = vector.load %arg2[%c0_1, %c0_2] : memref<6x32xbf16, #tpu.memory_space<vmem>>, vector<6x32xbf16>
    %cst = arith.constant dense<0.000000e+00> : vector<6x16xf32>
    %3 = tpu.matmul %2, %1, %cst {dimension_numbers = #tpu.dot_dimension_numbers<[1], [1], [0], [0], [0, 0, 1, 0], [], []>} : vector<6x32xbf16>, vector<16x32xbf16>, vector<6x16xf32> -> vector<6x16xf32>
    %c0_3 = arith.constant 0 : index
    %c0_4 = arith.constant 0 : index
    %4 = vector.load %arg3[%c0_3, %c0_4] : memref<6x1xf32, #tpu.memory_space<vmem>>, vector<6x1xf32>
    %5 = vector.broadcast %4 : vector<6x1xf32> to vector<6x16xf32>
    %6 = arith.addf %3, %5 : vector<6x16xf32>
    %c0_5 = arith.constant 0 : index
    %c0_6 = arith.constant 0 : index
    %7 = vector.load %arg4[%c0_5, %c0_6] : memref<6x16xf32, #tpu.memory_space<vmem>>, vector<6x16xf32>
    tpu.vector_store %arg4[%c0_5, %c0_6], %6 {strides = array<i32>} : memref<6x16xf32, #tpu.memory_space<vmem>>, vector<6x16xf32>,
    return
  }
  func.func @transform_0(%arg0: i32) -> (i32, i32) {
    %c0_i32 = arith.constant 0 : i32
    %c0_i32_0 = arith.constant 0 : i32
    return %arg0, %c0_i32 : i32, i32
  }
  func.func @transform_1(%arg0: i32) -> (i32, i32) {
    %c0_i32 = arith.constant 0 : i32
    %c0_i32_0 = arith.constant 0 : i32
    %c0_i32_1 = arith.constant 0 : i32
    return %c0_i32, %c0_i32_0 : i32, i32
  }
  func.func @transform_2(%arg0: i32) -> (i32, i32) {
    %c0_i32 = arith.constant 0 : i32
    %c0_i32_0 = arith.constant 0 : i32
    %c0_i32_1 = arith.constant 0 : i32
    return %c0_i32, %c0_i32_0 : i32, i32
  }
  func.func @transform_3(%arg0: i32) -> (i32, i32) {
    %c0_i32 = arith.constant 0 : i32
    %c0_i32_0 = arith.constant 0 : i32
    return %c0_i32, %arg0 : i32, i32
  }
}

</mosaic_0001>

<llo_original>
// kernel: _forward_impl.1
$region0: #{_forward_impl.1}
  #allocation0 [shape = 'u32[]', space=smem, size = 0x4, offset = 0x4, fixed_abs, tag = 'smem constant byte address 0x4 - core index']
  #allocation1 [shape = 'u32[144,128]{1,0:T(1,128)}', space=vmem, size = 0x12000, scoped, tag = 'internal scratch']
  %s0 = inlined_call_operand.vmem [shape: f32[16,32], index: 0, kind: input, shape index: {}]
  %s1 = inlined_call_operand.vmem [shape: bf16[6,32], index: 1, kind: input, shape index: {}]
  %s2 = inlined_call_operand.vmem [shape: f32[6,1], index: 2, kind: input, shape index: {}]
  %s3 = inlined_call_operand.vmem [shape: f32[6,16], index: 3, kind: output, shape index: {}]
  %s4 = sld [smem:[#allocation0]]
  $region22: #{_forward_impl.1} parent=0
    _
  %s6 = ssub.s32 1, %s4
  %s7 = scalar_select 0, %s6, %s4
  // Predicated region
  $region2: #{_forward_impl.1} parent=0 // pred_check
    _
  $region3: #{_forward_impl.1} parent=0 // pred_check_branch
    %9 = sbr.rel (0) target = $region5
  $region4: #{_forward_impl.1} parent=0 // pred_region
    _
  $region5: #{_forward_impl.1} parent=0 // pred_fallthru
    _
  // Predicated region
  $region6: #{_forward_impl.1} parent=0 // pred_check
    _
  $region7: #{_forward_impl.1} parent=0 // pred_check_branch
    %11 = sbr.rel (0) target = $region9
  $region8: #{_forward_impl.1} parent=0 // pred_region
    _
  $region9: #{_forward_impl.1} parent=0 // pred_fallthru
    _
  // Predicated region
  $region10: #{_forward_impl.1} parent=0 // pred_check
    _
  $region11: #{_forward_impl.1} parent=0 // pred_check_branch
    %13 = sbr.rel (0) target = $region13
  $region12: #{_forward_impl.1} parent=0 // pred_region
    _
  $region13: #{_forward_impl.1} parent=0 // pred_fallthru
    _
  %v15 = vld [vmem:[%s0] sm:$0xff]
  %v16 = vld [vmem:[%s0 + $0x8] sm:$0xff]
  %v17 = vpack.c.bf16 %v16, %v15
  %v18 = vld [vmem:[%s1] sm:$0x7]
  %v19 = vld [vmem:[%s2] sm:$0x3f]
  %21 = vset.pattern.permute.xlu0 0
  %22 = vperm.xlu0 %21, %v19
  %v23 = vpop.permute.xlu0 %22
  %vm25 = vcmask 261120
  %v27 = vsel %vm25, %v18, 0
  %v30 = vsel %vm25, %v17, 0
  %32 = vmatprep.subr.bf16.mxu0 0
  %33 = vmatpush1.bf16.xpose.msra.mxu0 0
  %34 = vmatprep.subr.bf16.mxu0 0
  %35 = vmatpush1.bf16.xpose.msra.mxu0 0
  %36 = vmatprep.subr.bf16.mxu0 0
  %37 = vmatpush1.bf16.xpose.msra.mxu0 0
  %38 = vmatprep.subr.bf16.mxu0 0
  %39 = vmatpush1.bf16.xpose.msra.mxu0 0
  %40 = vmatprep.subr.bf16.mxu0 0
  %41 = vmatpush1.bf16.xpose.msra.mxu0 0
  %42 = vmatprep.subr.bf16.mxu0 0
  %43 = vmatpush1.bf16.xpose.msra.mxu0 0
  %44 = vmatprep.subr.bf16.mxu0 0
  %45 = vmatpush1.bf16.xpose.msra.mxu0 0
  %46 = vmatprep.subr.bf16.mxu0 0
  %47 = vmatpush1.bf16.xpose.msra.mxu0 %v30
  %48 = vmatprep.subr.bf16.mxu0 0
  %49 = vmatpush2.bf16.xpose.msra.mxu0 0
  %50 = vmatprep.subr.bf16.mxu0 0
  %51 = vmatpush2.bf16.xpose.msra.mxu0 0
  %52 = vmatprep.subr.bf16.mxu0 0
  %53 = vmatpush2.bf16.xpose.msra.mxu0 0
  %54 = vmatprep.subr.bf16.mxu0 0
  %55 = vmatpush2.bf16.xpose.msra.mxu0 0
  %56 = vmatprep.subr.bf16.mxu0 0
  %57 = vmatpush2.bf16.xpose.msra.mxu0 0
  %58 = vmatprep.subr.bf16.mxu0 0
  %59 = vmatpush2.bf16.xpose.msra.mxu0 0
  %60 = vmatprep.subr.bf16.mxu0 0
  %61 = vmatpush2.bf16.xpose.msra.mxu0 0
  %62 = vmatprep.subr.bf16.mxu0 0
  %63 = vmatpush2.bf16.xpose.msra.mxu0 0
  %64 = vmatprep.mubr.bf16.mxu0 0
  %65 = vmatmul.mubr.bf16.gmra.mxu0 %v27
  %v66 = vpop.f32.mrf.mxu0
  %v67 = vadd.f32 %v23, %v66
  %v68 = vpop.f32.mrf.mxu0
  %v69 = vpop.f32.mrf.mxu0
  %v70 = vpop.f32.mrf.mxu0
  %71 = vdwg.mxu0
  %vm72 = vcmask 128000
  %73 = vst.msk [vmem:[%s3] sm:$0x3f] %vm72, %v67
  // Predicated region
  $region14: #{_forward_impl.1} parent=0 // pred_check
    _
  $region15: #{_forward_impl.1} parent=0 // pred_check_branch
    %75 = sbr.rel (0) target = $region17
  $region16: #{_forward_impl.1} parent=0 // pred_region
    _
  $region17: #{_forward_impl.1} parent=0 // pred_fallthru
    _
  // Predicated region
  $region18: #{_forward_impl.1} parent=0 // pred_check
    _
  $region19: #{_forward_impl.1} parent=0 // pred_check_branch
    %77 = sbr.rel (0) target = $region21
  $region20: #{_forward_impl.1} parent=0 // pred_region
    _
  $region21: #{_forward_impl.1} parent=0 // pred_fallthru
    _

</llo_original>
